<compile_context>
chip_gen: v7x
topology: tpu7x:2x2x1
jax: 0.10.0
libtpu: 0.0.40
codegen_flags: <defaults>
</compile_context>

<pallas_src>
import functools

import jax
import jax.numpy as jnp
from jax import lax
from jax.experimental import pallas as pl
from jax.experimental.pallas import tpu as pltpu


def _round_up(a, b):
    return (a + b - 1) // b * b


# ----------------------- prologue: row normalization -----------------------

def _normalize_kernel(x_ref, xn_ref):
    x = x_ref[...]
    sq = jnp.sum(x * x, axis=-1, keepdims=True)
    norm = jnp.maximum(jnp.sqrt(sq), 1e-8)   # matches torch.cosine_similarity eps
    xn_ref[...] = x / norm


def normalize_rows(x_pad, tm):
    """xn[i] = x[i] / max(||x[i]||, 1e-8), computed once per row tile."""
    n_pad, f_pad = x_pad.shape
    return pl.pallas_call(
        _normalize_kernel,
        out_shape=jax.ShapeDtypeStruct((n_pad, f_pad), jnp.float32),
        grid_spec=pltpu.PrefetchScalarGridSpec(
            num_scalar_prefetch=0,
            grid=(n_pad // tm,),
            in_specs=[pl.BlockSpec((tm, f_pad), lambda i: (i, 0))],
            out_specs=pl.BlockSpec((tm, f_pad), lambda i: (i, 0)),
        ),
        compiler_params=pltpu.CompilerParams(
            dimension_semantics=("parallel",),
            vmem_limit_bytes=32 * 1024 * 1024,
        ),
    )(x_pad)


# --------------------------- main tiled GCN layer ---------------------------

def _gcn_layer_kernel(xn_i_ref, xn_j_ref, x_j_ref, adj_ref, wt_ref, b_ref,
                      o_ref, acc_ref, *,
                      similarity_threshold, apply_relu, apply_log_softmax,
                      valid_out, aggr_dtype):
    j = pl.program_id(1)

    @pl.when(j == 0)
    def _():
        acc_ref[...] = jnp.zeros_like(acc_ref)

    # cosine-similarity block (TM, TN): contract last dims, no transpose.
    # Kept in f32 so the hard ">threshold" gate matches the reference exactly.
    sim = lax.dot_general(
        xn_i_ref[...], xn_j_ref[...],
        dimension_numbers=(((1,), (1,)), ((), ())),
        preferred_element_type=jnp.float32)

    # similarity-gated adjacency: single VPU select (no convert + multiply).
    # Padded nodes are inert because the padded adjacency entries are zero.
    a_masked = jnp.where(sim > similarity_threshold, adj_ref[...], 0.0)

    # accumulate gated aggregation: aggr_i += A_masked_block @ x_j
    acc_ref[...] += jnp.dot(a_masked.astype(aggr_dtype),
                            x_j_ref[...].astype(aggr_dtype),
                            preferred_element_type=jnp.float32)

    @pl.when(j == pl.num_programs(1) - 1)
    def _():
        # linear update + fused epilogue, written once per row tile.
        out = jnp.dot(acc_ref[...], wt_ref[...],
                      preferred_element_type=jnp.float32)
        out = out + b_ref[...]
        if apply_relu:
            out = jnp.maximum(out, 0.0)
        if apply_log_softmax:
            # mask padded output lanes so they don't perturb the softmax
            col = lax.broadcasted_iota(jnp.int32, out.shape, 1)
            out = jnp.where(col < valid_out, out, -1e30)
            m = jnp.max(out, axis=-1, keepdims=True)
            z = out - m
            lse = jnp.log(jnp.sum(jnp.exp(z), axis=-1, keepdims=True))
            out = z - lse
        o_ref[...] = out.astype(o_ref.dtype)


def gcn_layer_padded(x_pad, xn_pad, adj_pad, weight, bias, *,
                     similarity_threshold, apply_relu, apply_log_softmax,
                     tile, use_bf16_aggr=False):
    """One ImprovedGCNConv layer on pre-padded inputs.

    x_pad, xn_pad : (N_pad, F_in_pad)   zero-padded features / normalized rows
    adj_pad       : (N_pad, N_pad)      zero-padded dense adjacency
    Returns (N_pad, F_out_pad); real region is [:N, :F_out].
    """
    n_pad, f_in_pad = x_pad.shape
    f_out, f_in = weight.shape
    f_out_pad = _round_up(f_out, 128)

    # lane-dense padded W^T and bias (zeros in the padded region)
    wt = jnp.zeros((f_in_pad, f_out_pad), jnp.float32)
    wt = wt.at[:f_in, :f_out].set(weight.T.astype(jnp.float32))
    b2 = jnp.zeros((1, f_out_pad), jnp.float32).at[0, :f_out].set(bias)

    tm = tn = min(tile, n_pad)
    grid = (n_pad // tm, n_pad // tn)
    aggr_dtype = jnp.bfloat16 if use_bf16_aggr else jnp.float32

    kernel = functools.partial(
        _gcn_layer_kernel,
        similarity_threshold=similarity_threshold,
        apply_relu=apply_relu,
        apply_log_softmax=apply_log_softmax,
        valid_out=f_out,
        aggr_dtype=aggr_dtype,
    )

    return pl.pallas_call(
        kernel,
        out_shape=jax.ShapeDtypeStruct((n_pad, f_out_pad), jnp.float32),
        grid_spec=pltpu.PrefetchScalarGridSpec(
            num_scalar_prefetch=0,
            grid=grid,
            in_specs=[
                pl.BlockSpec((tm, f_in_pad), lambda i, j: (i, 0)),       # xn row tile
                pl.BlockSpec((tn, f_in_pad), lambda i, j: (j, 0)),       # xn col tile
                pl.BlockSpec((tn, f_in_pad), lambda i, j: (j, 0)),       # x  col tile
                pl.BlockSpec((tm, tn),       lambda i, j: (i, j)),       # adj block
                pl.BlockSpec((f_in_pad, f_out_pad), lambda i, j: (0, 0)),  # W^T
                pl.BlockSpec((1, f_out_pad),        lambda i, j: (0, 0)),  # bias
            ],
            out_specs=pl.BlockSpec((tm, f_out_pad), lambda i, j: (i, 0)),
            scratch_shapes=[pltpu.VMEM((tm, f_in_pad), jnp.float32)],
        ),
        compiler_params=pltpu.CompilerParams(
            dimension_semantics=("parallel", "arbitrary"),
            vmem_limit_bytes=32 * 1024 * 1024,   # fits v7x (64 MiB phys) w/ headroom
        ),
    )(xn_pad, xn_pad, x_pad, adj_pad, wt, b2)


# ----------------------------- SMART model glue -----------------------------

def build_adjacency(edge_index, num_nodes):
    """adj[i, j] = number of edges j -> i, plus an unconditional self loop."""
    src = edge_index[0]
    dst = edge_index[1]
    adj = jnp.zeros((num_nodes, num_nodes), jnp.float32)
    adj = adj.at[dst, src].add(1.0)                     # message x_j flows j -> i
    adj = adj + jnp.eye(num_nodes, dtype=jnp.float32)   # add_self_loops
    return adj


def init_linear(key, in_dim, out_dim):
    """nn.Linear: xavier_uniform_ weight (out, in), default-init bias."""
    kw, kb = jax.random.split(key)
    bound_w = jnp.sqrt(6.0 / (in_dim + out_dim))
    w = jax.random.uniform(kw, (out_dim, in_dim), jnp.float32, -bound_w, bound_w)
    bound_b = 1.0 / jnp.sqrt(in_dim)
    b = jax.random.uniform(kb, (out_dim,), jnp.float32, -bound_b, bound_b)
    return w, b


def init_smart_params(key, input_dim, hidden_dim, output_dim, num_layers=2):
    # num_layers=2 => convs = [GCN(input,hidden), GCN(hidden,output)]
    assert num_layers == 2, "this script instantiates the default num_layers=2"
    k1, k2 = jax.random.split(key)
    w1, b1 = init_linear(k1, input_dim, hidden_dim)
    w2, b2 = init_linear(k2, hidden_dim, output_dim)
    return {"w1": w1, "b1": b1, "w2": w2, "b2": b2}


def smart_forward(params, x, edge_index, *, similarity_threshold=0.5, tile=512):
    n, f_in = x.shape
    adj = build_adjacency(edge_index, n)

    # pad once: rows to a tile multiple, features to lane-dense 128 multiples
    tile_eff = min(tile, _round_up(n, 128))
    n_pad = _round_up(n, tile_eff)
    f_in_pad = _round_up(f_in, 128)

    x_pad = jnp.zeros((n_pad, f_in_pad), jnp.float32).at[:n, :f_in].set(x)
    adj_pad = jnp.zeros((n_pad, n_pad), jnp.float32).at[:n, :n].set(adj)

    # layer 1: GCN -> ReLU -> dropout(identity, inference mode)
    xn1 = normalize_rows(x_pad, tile_eff)
    h_pad = gcn_layer_padded(x_pad, xn1, adj_pad, params["w1"], params["b1"],
                             similarity_threshold=similarity_threshold,
                             apply_relu=True, apply_log_softmax=False,
                             tile=tile_eff)

    # layer 2 (last): GCN -> log_softmax(dim=-1)
    xn2 = normalize_rows(h_pad, tile_eff)
    out_pad = gcn_layer_padded(h_pad, xn2, adj_pad, params["w2"], params["b2"],
                               similarity_threshold=similarity_threshold,
                               apply_relu=False, apply_log_softmax=True,
                               tile=tile_eff)

    out_dim = params["w2"].shape[0]
    return out_pad[:n, :out_dim]


# ----------------------------- pure-JAX reference -----------------------------

def _ref_layer(x, adj, w, b, thresh, relu, logsm):
    norm = jnp.maximum(jnp.linalg.norm(x, axis=-1, keepdims=True), 1e-8)
    xn = x / norm
    sim = xn @ xn.T
    a = adj * (sim > thresh).astype(jnp.float32)
    out = (a @ x) @ w.T + b
    if relu:
        out = jnp.maximum(out, 0.0)
    if logsm:
        out = jax.nn.log_softmax(out, axis=-1)
    return out


def smart_forward_ref(params, x, edge_index, *, similarity_threshold=0.5):
    adj = build_adjacency(edge_index, x.shape[0])
    h = _ref_layer(x, adj, params["w1"], params["b1"],
                   similarity_threshold, True, False)
    return _ref_layer(h, adj, params["w2"], params["b2"],
                      similarity_threshold, False, True)


# ----------------------------- main -----------------------------

if __name__ == "__main__":
    key = jax.random.PRNGKey(0)
    k_x, k_e, k_p = jax.random.split(key, 3)

    num_nodes = 16
    input_dim, hidden_dim, output_dim = 8, 32, 4
    num_edges = 24
    similarity_threshold = 0.5

    x = jax.random.normal(k_x, (num_nodes, input_dim), jnp.float32)
    edge_index = jax.random.randint(k_e, (2, num_edges), 0, num_nodes,
                                    dtype=jnp.int32)

    params = init_smart_params(k_p, input_dim, hidden_dim, output_dim)

    out = smart_forward(params, x, edge_index,
                        similarity_threshold=similarity_threshold)
    out = jax.block_until_ready(out)

    ref = smart_forward_ref(params, x, edge_index,
                            similarity_threshold=similarity_threshold)
    assert out.shape == (num_nodes, output_dim)
    assert jnp.allclose(out, ref, atol=1e-4, rtol=1e-4), "mismatch vs reference"

    print("KERNEL_OK")
</pallas_src>

<mosaic_0001>
module attributes {stable_mosaic.version = 11 : i64} {
  func.func @_normalize_kernel(%arg0: i32, %arg1: memref<128x128xf32, #tpu.memory_space<vmem>>, %arg2: memref<128x128xf32, #tpu.memory_space<vmem>>) attributes {dimension_semantics = [#tpu.dimension_semantics<parallel>], iteration_bounds = array<i64: 1>, scalar_prefetch = 0 : i64, scratch_operands = 0 : i64, tpu.core_type = #tpu.core_type<tc>, window_params = [{transform_indices = @transform_0, window_bounds = array<i64: 128, 128>}, {transform_indices = @transform_1, window_bounds = array<i64: 128, 128>}]} {
    %c0 = arith.constant 0 : index
    %c0_0 = arith.constant 0 : index
    %0 = vector.load %arg1[%c0, %c0_0] : memref<128x128xf32, #tpu.memory_space<vmem>>, vector<128x128xf32>
    %1 = arith.mulf %0, %0 : vector<128x128xf32>
    %cst = arith.constant dense<0.000000e+00> : vector<128xf32>
    %2 = vector.multi_reduction <add>, %1, %cst [1] : vector<128x128xf32> to vector<128xf32>
    %3 = vector.shape_cast %2 : vector<128xf32> to vector<128x1xf32>
    %4 = math.sqrt %3 : vector<128x1xf32>
    %cst_1 = arith.constant 9.99999993E-9 : f32
    %5 = vector.broadcast %cst_1 : f32 to vector<128x1xf32>
    %6 = arith.maximumf %4, %5 : vector<128x1xf32>
    %7 = vector.broadcast %6 : vector<128x1xf32> to vector<128x128xf32>
    %8 = arith.divf %0, %7 : vector<128x128xf32>
    %c0_2 = arith.constant 0 : index
    %c0_3 = arith.constant 0 : index
    %9 = vector.load %arg2[%c0_2, %c0_3] : memref<128x128xf32, #tpu.memory_space<vmem>>, vector<128x128xf32>
    tpu.vector_store %arg2[%c0_2, %c0_3], %8 {strides = array<i32>} : memref<128x128xf32, #tpu.memory_space<vmem>>, vector<128x128xf32>,
    return
  }
  func.func @transform_0(%arg0: i32) -> (i32, i32) {
    %c0_i32 = arith.constant 0 : i32
    %c0_i32_0 = arith.constant 0 : i32
    return %arg0, %c0_i32 : i32, i32
  }
  func.func @transform_1(%arg0: i32) -> (i32, i32) {
    %c0_i32 = arith.constant 0 : i32
    %c0_i32_0 = arith.constant 0 : i32
    return %arg0, %c0_i32 : i32, i32
  }
}

</mosaic_0001>

<llo_original>
// kernel: tpu_custom_call.1
$region0: #{tpu_custom_call.1}
  #allocation0 [shape = 'u32[]', space=smem, size = 0x4, offset = 0x4, fixed_abs, tag = 'smem constant byte address 0x4 - core index']
  #allocation1 [shape = 'u32[144,128]{1,0:T(1,128)}', space=vmem, size = 0x12000, scoped, tag = 'internal scratch']
  %s0 = inlined_call_operand.hbm [shape: f32[128,128], index: 0, kind: input, shape index: {}]
  %s1 = inlined_call_operand.hbm [shape: f32[128,128], index: 1, kind: output, shape index: {}]
  %s2 = sld [smem:[#allocation0]]
  $region18: #{tpu_custom_call.1} parent=0
    _
  %s4 = ssub.s32 1, %s2
  %s5 = scalar_select 0, %s4, %s2
  $region1: #{tpu_custom_call.1} parent=0
    #allocation2 [shape = 'u8[65536]{0}', space=vmem, size = 0x10000, scoped, tag = 'input window, operand 0, single buffered']
    #allocation3 [shape = 's32[1]{0}', space=sflag, size = 0x4, scoped, tag = 'scoped memory for tpu_custom_call.1']
    #allocation4 [shape = 's32[1]{0}', space=sflag, size = 0x4, scoped, tag = 'scoped memory for tpu_custom_call.1']
    #allocation5 [shape = 'u8[65536]{0}', space=vmem, size = 0x10000, scoped, tag = 'output window, operand 0, single buffered']
    %6 = vsyncpa [#allocation3], 0
    %7 = vsyncpa [#allocation4], 0
    // Predicated region
    $region2: #{tpu_custom_call.1} parent=1 // pred_check
      _
    $region3: #{tpu_custom_call.1} parent=1 // pred_check_branch
      %9 = sbr.rel (0) target = $region5
    $region4: #{tpu_custom_call.1} parent=1 // pred_region
      %s11 = ssub.s32 2048, 2048
      %12 = vsyncadd [#allocation3], %s11
      %s13 = sshll.u32 [#allocation2], 4
      %s14 = int_to_ptr.vmem [resolvable:$true] %s13
      %19 = dma.hbm_to_vmem [thread:$0]  %s0, 2048, %s14, [#allocation3], 128, 128, 8
    $region5: #{tpu_custom_call.1} parent=1 // pred_fallthru
      _
    // Predicated region
    $region6: #{tpu_custom_call.1} parent=1 // pred_check
      _
    $region7: #{tpu_custom_call.1} parent=1 // pred_check_branch
      %21 = sbr.rel (0) target = $region9
    $region8: #{tpu_custom_call.1} parent=1 // pred_region
      %22 = dma.done [#allocation3], 2048
    $region9: #{tpu_custom_call.1} parent=1 // pred_fallthru
      _
    %v23 = vld [vmem:[#allocation2] sm:$0xff]
    %v24 = vld [vmem:[#allocation2 + $0x8] sm:$0xff]
    %v25 = vld [vmem:[#allocation2 + $0x10] sm:$0xff]
    %v26 = vld [vmem:[#allocation2 + $0x18] sm:$0xff]
    %v27 = vld [vmem:[#allocation2 + $0x20] sm:$0xff]
    %v28 = vld [vmem:[#allocation2 + $0x28] sm:$0xff]
    %v29 = vld [vmem:[#allocation2 + $0x30] sm:$0xff]
    %v30 = vld [vmem:[#allocation2 + $0x38] sm:$0xff]
    %v31 = vld [vmem:[#allocation2 + $0x40] sm:$0xff]
    %v32 = vld [vmem:[#allocation2 + $0x48] sm:$0xff]
    %v33 = vld [vmem:[#allocation2 + $0x50] sm:$0xff]
    %v34 = vld [vmem:[#allocation2 + $0x58] sm:$0xff]
    %v35 = vld [vmem:[#allocation2 + $0x60] sm:$0xff]
    %v36 = vld [vmem:[#allocation2 + $0x68] sm:$0xff]
    %v37 = vld [vmem:[#allocation2 + $0x70] sm:$0xff]
    %v38 = vld [vmem:[#allocation2 + $0x78] sm:$0xff]
    %v39 = vmul.f32 %v23, %v23
    %v40 = vmul.f32 %v24, %v24
    %v41 = vmul.f32 %v25, %v25
    %v42 = vmul.f32 %v26, %v26
    %v43 = vmul.f32 %v27, %v27
    %v44 = vmul.f32 %v28, %v28
    %v45 = vmul.f32 %v29, %v29
    %v46 = vmul.f32 %v30, %v30
    %v47 = vmul.f32 %v31, %v31
    %v48 = vmul.f32 %v32, %v32
    %v49 = vmul.f32 %v33, %v33
    %v50 = vmul.f32 %v34, %v34
    %v51 = vmul.f32 %v35, %v35
    %v52 = vmul.f32 %v36, %v36
    %v53 = vmul.f32 %v37, %v37
    %v54 = vmul.f32 %v38, %v38
    %55 = vadd.xlane.f32.xlu0 %v39
    %v56 = vpop.xlane.xlu0 %55
    %57 = vadd.xlane.f32.xlu0 %v40
    %v58 = vpop.xlane.xlu0 %57
    %59 = vadd.xlane.f32.xlu0 %v41
    %v60 = vpop.xlane.xlu0 %59
    %61 = vadd.xlane.f32.xlu0 %v42
    %v62 = vpop.xlane.xlu0 %61
    %63 = vadd.xlane.f32.xlu0 %v43
    %v64 = vpop.xlane.xlu0 %63
    %65 = vadd.xlane.f32.xlu0 %v44
    %v66 = vpop.xlane.xlu0 %65
    %67 = vadd.xlane.f32.xlu0 %v45
    %v68 = vpop.xlane.xlu0 %67
    %69 = vadd.xlane.f32.xlu0 %v46
    %v70 = vpop.xlane.xlu0 %69
    %71 = vadd.xlane.f32.xlu0 %v47
    %v72 = vpop.xlane.xlu0 %71
    %73 = vadd.xlane.f32.xlu0 %v48
    %v74 = vpop.xlane.xlu0 %73
    %75 = vadd.xlane.f32.xlu0 %v49
    %v76 = vpop.xlane.xlu0 %75
    %77 = vadd.xlane.f32.xlu0 %v50
    %v78 = vpop.xlane.xlu0 %77
    %79 = vadd.xlane.f32.xlu0 %v51
    %v80 = vpop.xlane.xlu0 %79
    %81 = vadd.xlane.f32.xlu0 %v52
    %v82 = vpop.xlane.xlu0 %81
    %83 = vadd.xlane.f32.xlu0 %v53
    %v84 = vpop.xlane.xlu0 %83
    %85 = vadd.xlane.f32.xlu0 %v54
    %v86 = vpop.xlane.xlu0 %85
    %v87 = vrsqrt.pop %v56
    %v88 = vmul.f32 %v56, %v87
    %vm89 = vcmp.eq.f32.partialorder %v56, inf
    %v90 = vsel %vm89, %v56, %v88
    %vm91 = vcmp.eq.f32.partialorder %v56, 0.0
    %v92 = vand.u32 %v56, 2147483648
    %v93 = vsel %vm91, %v92, %v90
    %v94 = vrsqrt.pop %v58
    %v95 = vmul.f32 %v58, %v94
    %vm96 = vcmp.eq.f32.partialorder %v58, inf
    %v97 = vsel %vm96, %v58, %v95
    %vm98 = vcmp.eq.f32.partialorder %v58, 0.0
    %v99 = vand.u32 %v58, 2147483648
    %v100 = vsel %vm98, %v99, %v97
    %v101 = vrsqrt.pop %v60
    %v102 = vmul.f32 %v60, %v101
    %vm103 = vcmp.eq.f32.partialorder %v60, inf
    %v104 = vsel %vm103, %v60, %v102
    %vm105 = vcmp.eq.f32.partialorder %v60, 0.0
    %v106 = vand.u32 %v60, 2147483648
    %v107 = vsel %vm105, %v106, %v104
    %v108 = vrsqrt.pop %v62
    %v109 = vmul.f32 %v62, %v108
    %vm110 = vcmp.eq.f32.partialorder %v62, inf
    %v111 = vsel %vm110, %v62, %v109
    %vm112 = vcmp.eq.f32.partialorder %v62, 0.0
    %v113 = vand.u32 %v62, 2147483648
    %v114 = vsel %vm112, %v113, %v111
    %v115 = vrsqrt.pop %v64
    %v116 = vmul.f32 %v64, %v115
    %vm117 = vcmp.eq.f32.partialorder %v64, inf
    %v118 = vsel %vm117, %v64, %v116
    %vm119 = vcmp.eq.f32.partialorder %v64, 0.0
    %v120 = vand.u32 %v64, 2147483648
    %v121 = vsel %vm119, %v120, %v118
    %v122 = vrsqrt.pop %v66
    %v123 = vmul.f32 %v66, %v122
    %vm124 = vcmp.eq.f32.partialorder %v66, inf
    %v125 = vsel %vm124, %v66, %v123
    %vm126 = vcmp.eq.f32.partialorder %v66, 0.0
    %v127 = vand.u32 %v66, 2147483648
    %v128 = vsel %vm126, %v127, %v125
    %v129 = vrsqrt.pop %v68
    %v130 = vmul.f32 %v68, %v129
    %vm131 = vcmp.eq.f32.partialorder %v68, inf
    %v132 = vsel %vm131, %v68, %v130
    %vm133 = vcmp.eq.f32.partialorder %v68, 0.0
    %v134 = vand.u32 %v68, 2147483648
    %v135 = vsel %vm133, %v134, %v132
    %v136 = vrsqrt.pop %v70
    %v137 = vmul.f32 %v70, %v136
    %vm138 = vcmp.eq.f32.partialorder %v70, inf
    %v139 = vsel %vm138, %v70, %v137
    %vm140 = vcmp.eq.f32.partialorder %v70, 0.0
    %v141 = vand.u32 %v70, 2147483648
    %v142 = vsel %vm140, %v141, %v139
    %v143 = vrsqrt.pop %v72
    %v144 = vmul.f32 %v72, %v143
    %vm145 = vcmp.eq.f32.partialorder %v72, inf
    %v146 = vsel %vm145, %v72, %v144
    %vm147 = vcmp.eq.f32.partialorder %v72, 0.0
    %v148 = vand.u32 %v72, 2147483648
    %v149 = vsel %vm147, %v148, %v146
    %v150 = vrsqrt.pop %v74
    %v151 = vmul.f32 %v74, %v150
    %vm152 = vcmp.eq.f32.partialorder %v74, inf
    %v153 = vsel %vm152, %v74, %v151
    %vm154 = vcmp.eq.f32.partialorder %v74, 0.0
    %v155 = vand.u32 %v74, 2147483648
    %v156 = vsel %vm154, %v155, %v153
    %v157 = vrsqrt.pop %v76
    %v158 = vmul.f32 %v76, %v157
    %vm159 = vcmp.eq.f32.partialorder %v76, inf
    %v160 = vsel %vm159, %v76, %v158
    %vm161 = vcmp.eq.f32.partialorder %v76, 0.0
    %v162 = vand.u32 %v76, 2147483648
    %v163 = vsel %vm161, %v162, %v160
    %v164 = vrsqrt.pop %v78
    %v165 = vmul.f32 %v78, %v164
    %vm166 = vcmp.eq.f32.partialorder %v78, inf
    %v167 = vsel %vm166, %v78, %v165
    %vm168 = vcmp.eq.f32.partialorder %v78, 0.0
    %v169 = vand.u32 %v78, 2147483648
    %v170 = vsel %vm168, %v169, %v167
    %v171 = vrsqrt.pop %v80
    %v172 = vmul.f32 %v80, %v171
    %vm173 = vcmp.eq.f32.partialorder %v80, inf
    %v174 = vsel %vm173, %v80, %v172
    %vm175 = vcmp.eq.f32.partialorder %v80, 0.0
    %v176 = vand.u32 %v80, 2147483648
    %v177 = vsel %vm175, %v176, %v174
    %v178 = vrsqrt.pop %v82
    %v179 = vmul.f32 %v82, %v178
    %vm180 = vcmp.eq.f32.partialorder %v82, inf
    %v181 = vsel %vm180, %v82, %v179
    %vm182 = vcmp.eq.f32.partialorder %v82, 0.0
    %v183 = vand.u32 %v82, 2147483648
    %v184 = vsel %vm182, %v183, %v181
    %v185 = vrsqrt.pop %v84
    %v186 = vmul.f32 %v84, %v185
    %vm187 = vcmp.eq.f32.partialorder %v84, inf
    %v188 = vsel %vm187, %v84, %v186
    %vm189 = vcmp.eq.f32.partialorder %v84, 0.0
    %v190 = vand.u32 %v84, 2147483648
    %v191 = vsel %vm189, %v190, %v188
    %v192 = vrsqrt.pop %v86
    %v193 = vmul.f32 %v86, %v192
    %vm194 = vcmp.eq.f32.partialorder %v86, inf
    %v195 = vsel %vm194, %v86, %v193
    %vm196 = vcmp.eq.f32.partialorder %v86, 0.0
    %v197 = vand.u32 %v86, 2147483648
    %v198 = vsel %vm196, %v197, %v195
    %v199 = vmax.f32 %v93, 1e-08
    %v200 = vmax.f32 %v100, 1e-08
    %v201 = vmax.f32 %v107, 1e-08
    %v202 = vmax.f32 %v114, 1e-08
    %v203 = vmax.f32 %v121, 1e-08
    %v204 = vmax.f32 %v128, 1e-08
    %v205 = vmax.f32 %v135, 1e-08
    %v206 = vmax.f32 %v142, 1e-08
    %v207 = vmax.f32 %v149, 1e-08
    %v208 = vmax.f32 %v156, 1e-08
    %v209 = vmax.f32 %v163, 1e-08
    %v210 = vmax.f32 %v170, 1e-08
    %v211 = vmax.f32 %v177, 1e-08
    %v212 = vmax.f32 %v184, 1e-08
    %v213 = vmax.f32 %v191, 1e-08
    %v214 = vmax.f32 %v198, 1e-08
    %v215 = vrcp.pop %v199
    %v216 = vmul.f32 %v23, %v215
    %v217 = vrcp.pop %v200
    %v218 = vmul.f32 %v24, %v217
    %v219 = vrcp.pop %v201
    %v220 = vmul.f32 %v25, %v219
    %v221 = vrcp.pop %v202
    %v222 = vmul.f32 %v26, %v221
    %v223 = vrcp.pop %v203
    %v224 = vmul.f32 %v27, %v223
    %v225 = vrcp.pop %v204
    %v226 = vmul.f32 %v28, %v225
    %v227 = vrcp.pop %v205
    %v228 = vmul.f32 %v29, %v227
    %v229 = vrcp.pop %v206
    %v230 = vmul.f32 %v30, %v229
    %v231 = vrcp.pop %v207
    %v232 = vmul.f32 %v31, %v231
    %v233 = vrcp.pop %v208
    %v234 = vmul.f32 %v32, %v233
    %v235 = vrcp.pop %v209
    %v236 = vmul.f32 %v33, %v235
    %v237 = vrcp.pop %v210
    %v238 = vmul.f32 %v34, %v237
    %v239 = vrcp.pop %v211
    %v240 = vmul.f32 %v35, %v239
    %v241 = vrcp.pop %v212
    %v242 = vmul.f32 %v36, %v241
    %v243 = vrcp.pop %v213
    %v244 = vmul.f32 %v37, %v243
    %v245 = vrcp.pop %v214
    %v246 = vmul.f32 %v38, %v245
    %247 = vst [vmem:[#allocation5] sm:$0xff] %v216
    %248 = vst [vmem:[#allocation5 + $0x8] sm:$0xff] %v218
    %249 = vst [vmem:[#allocation5 + $0x10] sm:$0xff] %v220
    %250 = vst [vmem:[#allocation5 + $0x18] sm:$0xff] %v222
    %251 = vst [vmem:[#allocation5 + $0x20] sm:$0xff] %v224
    %252 = vst [vmem:[#allocation5 + $0x28] sm:$0xff] %v226
    %253 = vst [vmem:[#allocation5 + $0x30] sm:$0xff] %v228
    %254 = vst [vmem:[#allocation5 + $0x38] sm:$0xff] %v230
    %255 = vst [vmem:[#allocation5 + $0x40] sm:$0xff] %v232
    %256 = vst [vmem:[#allocation5 + $0x48] sm:$0xff] %v234
    %257 = vst [vmem:[#allocation5 + $0x50] sm:$0xff] %v236
    %258 = vst [vmem:[#allocation5 + $0x58] sm:$0xff] %v238
    %259 = vst [vmem:[#allocation5 + $0x60] sm:$0xff] %v240
    %260 = vst [vmem:[#allocation5 + $0x68] sm:$0xff] %v242
    %261 = vst [vmem:[#allocation5 + $0x70] sm:$0xff] %v244
    %262 = vst [vmem:[#allocation5 + $0x78] sm:$0xff] %v246
    // Predicated region
    $region10: #{tpu_custom_call.1} parent=1 // pred_check
      _
    $region11: #{tpu_custom_call.1} parent=1 // pred_check_branch
      %264 = sbr.rel (0) target = $region13
    $region12: #{tpu_custom_call.1} parent=1 // pred_region
      %s266 = ssub.s32 2048, 2048
      %267 = vsyncadd [#allocation4], %s266
      %s268 = sshll.u32 [#allocation5], 4
      %s269 = int_to_ptr.vmem [resolvable:$true] %s268
      %274 = dma.vmem_to_hbm [thread:$0]  %s269, 2048, %s1, [#allocation4], 128, 128, 8
    $region13: #{tpu_custom_call.1} parent=1 // pred_fallthru
      _
    // Predicated region
    $region14: #{tpu_custom_call.1} parent=1 // pred_check
      _
    $region15: #{tpu_custom_call.1} parent=1 // pred_check_branch
      %276 = sbr.rel (0) target = $region17
    $region16: #{tpu_custom_call.1} parent=1 // pred_region
      %277 = dma.done [#allocation4], 2048
    $region17: #{tpu_custom_call.1} parent=1 // pred_fallthru
      _
    %278 = vsyncpa [#allocation3], 1
    %279 = vsyncpa [#allocation4], 1

</llo_original>
